<compile_context>
chip_gen: v7x
topology: tpu7x:2x2x1
jax: 0.10.0
libtpu: 0.0.40
codegen_flags: <defaults>
</compile_context>

<pallas_src>
from functools import partial

import jax
import jax.numpy as jnp
from jax.experimental import pallas as pl
from jax.experimental.pallas import tpu as pltpu


def _round_up(x, m):
    return (x + m - 1) // m * m


def _pick_row_tile(h_out, w_out):
    """Rows per grid step: target ~256 MXU M rows, keep >=2 row tiles per image when possible."""
    target_m = 256
    th = max(1, min(h_out, target_m // max(w_out, 1)))
    if th >= h_out and h_out >= 2:
        th = pl.cdiv(h_out, 2)     # at least two row tiles per image (pipelining / 2 TCs on v7x)
    return max(int(th), 1)


def _conv_bn_relu_kernel(x_ref, w_ref, scale_ref, shift_ref, o_ref, *,
                         KH, KW, TH, W_out, C_pad, fold_kw, need_relu):
    """One grid step = one (image, output-row-tile).

    fold_kw=True  (tiny C_in):
        x_ref : (1, Hp_pad, W_out, KW*C_in)   KW-folded padded image (bf16)
        w_ref : (KH, KW*C_in, C_pad)          weight, KW*C_in folded into contraction
    fold_kw=False (C_in large enough that KW*C_in >= 128):
        x_ref : (1, Hp_pad, Wp, C_in)         padded NHWC image (bf16)
        w_ref : (KH, KW, C_in, C_pad)
    scale_ref / shift_ref : (1, C_pad)        folded BN scale / shift (f32, padded lanes are 0)
    o_ref : (1, TH, W_out, C_pad)             lane-dense output row tile (out_dtype)
    """
    r = pl.program_id(1)
    row0 = pl.multiple_of(r * TH, TH)

    acc = jnp.zeros((TH * W_out, C_pad), dtype=jnp.float32)
    if fold_kw:
        for kh in range(KH):
            patch = x_ref[0, pl.ds(row0 + kh, TH), :, :]          # (TH, W_out, KW*C_in)
            patch = patch.reshape(TH * W_out, patch.shape[-1])    # collapse leading dims only
            acc = acc + jnp.dot(patch, w_ref[kh],
                                preferred_element_type=jnp.float32)
    else:
        for kh in range(KH):
            for kw in range(KW):
                patch = x_ref[0, pl.ds(row0 + kh, TH), pl.ds(kw, W_out), :]   # (TH, W_out, C_in)
                patch = patch.reshape(TH * W_out, patch.shape[-1])
                acc = acc + jnp.dot(patch, w_ref[kh, kw],
                                    preferred_element_type=jnp.float32)

    # Fused inference-BatchNorm + optional ReLU, in f32; store in o_ref.dtype (bf16 by default).
    y = acc * scale_ref[0] + shift_ref[0]
    if need_relu:
        y = jnp.maximum(y, 0.0)
    o_ref[0] = y.reshape(TH, W_out, C_pad).astype(o_ref.dtype)


def basic_conv2d_nhwc(x_nhwc, weight_oihw, gamma, beta, running_mean, running_var, *,
                      stride=1, padding=0, dilation=1, need_relu=True, eps=1e-5,
                      compute_dtype=jnp.bfloat16, out_dtype=jnp.bfloat16):
    """NHWC forward pass. x_nhwc: (N, H, W, C_in); returns (N, H_out, W_out, C_out) in out_dtype."""
    # TODO(synk): specialized to stride=1, dilation=1, groups=1 (the BasicConv2d defaults).
    assert stride == 1 and dilation == 1, "kernel specialized to stride=1, dilation=1"
    N, H, W, C_in = x_nhwc.shape
    C_out, C_in_w, KH, KW = weight_oihw.shape
    assert C_in == C_in_w

    H_out = H + 2 * padding - KH + 1
    W_out = W + 2 * padding - KW + 1
    assert H_out > 0 and W_out > 0

    C_pad = _round_up(max(C_out, 128), 128)       # lane-dense output channels
    TH = _pick_row_tile(H_out, W_out)
    H_out_pad = _round_up(H_out, TH)              # odd H_out handled by padding rows
    R = H_out_pad // TH
    Hp_pad = H_out_pad + KH - 1                   # input rows needed (conv pad + row-tile pad)
    Wp = W + 2 * padding
    KC = KW * C_in
    fold_kw = KC < 128                            # only fold KW for tiny C_in

    # --- wrapper layout glue (bf16 to halve HBM traffic) ---------------------------------
    x = x_nhwc.astype(compute_dtype)
    extra_rows = Hp_pad - (H + 2 * padding)
    x_pad = jnp.pad(x, ((0, 0), (padding, padding + extra_rows),
                        (padding, padding), (0, 0)))
    if fold_kw:
        # Fold KW into the contraction axis: (N, Hp_pad, W_out, KW*C_in).
        x_in = jnp.concatenate([x_pad[:, :, kw:kw + W_out, :] for kw in range(KW)], axis=-1)
        in_spec_x = pl.BlockSpec((1, Hp_pad, W_out, KC), lambda n, r: (n, 0, 0, 0))
        x_minor = W_out * KC
    else:
        x_in = x_pad
        in_spec_x = pl.BlockSpec((1, Hp_pad, Wp, C_in), lambda n, r: (n, 0, 0, 0))
        x_minor = Wp * C_in

    # Weight: OIHW -> (KH, KW, C_in, C_out), zero-pad C_out to C_pad, bf16.
    w = jnp.transpose(weight_oihw, (2, 3, 1, 0)).astype(jnp.float32)
    w = jnp.pad(w, ((0, 0), (0, 0), (0, 0), (0, C_pad - C_out)))
    if fold_kw:
        w = w.reshape(KH, KC, C_pad)
        in_spec_w = pl.BlockSpec((KH, KC, C_pad), lambda n, r: (0, 0, 0))
    else:
        in_spec_w = pl.BlockSpec((KH, KW, C_in, C_pad), lambda n, r: (0, 0, 0, 0))
    w = w.astype(compute_dtype)

    # Fold BatchNorm (inference running stats) into per-channel scale/shift (f32, pads are 0).
    scale = gamma.astype(jnp.float32) / jnp.sqrt(running_var.astype(jnp.float32) + eps)
    shift = beta.astype(jnp.float32) - running_mean.astype(jnp.float32) * scale
    scale = jnp.pad(scale, (0, C_pad - C_out)).reshape(1, C_pad)
    shift = jnp.pad(shift, (0, C_pad - C_out)).reshape(1, C_pad)

    kernel = partial(_conv_bn_relu_kernel, KH=KH, KW=KW, TH=TH, W_out=W_out,
                     C_pad=C_pad, fold_kw=fold_kw, need_relu=need_relu)

    # VMEM budget: input block + weight + constants + output block, double-buffered, + f32 acc.
    # TODO(synk): constants could be single-buffered (pipeline_mode=pl.Buffered(1)) to reclaim
    # VMEM on v7x; kept default here for lowering robustness.
    in_item = jnp.dtype(compute_dtype).itemsize
    out_item = jnp.dtype(out_dtype).itemsize
    x_block_bytes = Hp_pad * x_minor * in_item
    w_bytes = int(w.size) * in_item
    const_bytes = 2 * C_pad * 4
    out_block_bytes = TH * W_out * C_pad * out_item
    acc_bytes = TH * W_out * C_pad * 4
    vmem_needed = 2 * (x_block_bytes + w_bytes + const_bytes + out_block_bytes) + acc_bytes
    vmem_limit = int(min(max(vmem_needed + (8 << 20), 32 << 20), 64 << 20))

    flops = 2 * N * H_out_pad * W_out * KH * KW * C_in * C_out
    bytes_accessed = (int(x_in.size) * in_item + int(w.size) * in_item + 2 * C_pad * 4
                      + N * H_out_pad * W_out * C_pad * out_item)

    out_pad = pl.pallas_call(
        kernel,
        out_shape=jax.ShapeDtypeStruct((N, H_out_pad, W_out, C_pad), out_dtype),
        grid_spec=pltpu.PrefetchScalarGridSpec(
            num_scalar_prefetch=0,
            grid=(N, R),
            in_specs=[
                in_spec_x,                                            # per-image input, constant over r
                in_spec_w,
                pl.BlockSpec((1, C_pad), lambda n, r: (0, 0)),        # BN scale
                pl.BlockSpec((1, C_pad), lambda n, r: (0, 0)),        # BN shift
            ],
            out_specs=pl.BlockSpec((1, TH, W_out, C_pad), lambda n, r: (n, r, 0, 0)),
        ),
        compiler_params=pltpu.CompilerParams(
            dimension_semantics=("parallel", "parallel"),
            vmem_limit_bytes=vmem_limit),
        cost_estimate=pl.CostEstimate(flops=flops, transcendentals=0,
                                      bytes_accessed=bytes_accessed),
    )(x_in, w, scale, shift)

    # TODO(synk): when C_out << 128 and (W_out*C_out) % 128 == 0 an in-kernel repack to a
    # lane-dense (TH, W_out*C_out) slab would remove the channel-padding writeback entirely;
    # kept padded-NHWC output here and the slice is left to be fused into the consumer.
    # TODO(synk): for very large images on v7x, switch the image input to memory_space=pl.ANY
    # and double-buffer (TH+KH-1)-row halo stripes with pltpu.make_async_copy.
    return out_pad[:, :H_out, :, :C_out]


def basic_conv2d(x_nchw, weight_oihw, gamma, beta, running_mean, running_var, *,
                 stride=1, padding=0, dilation=1, need_relu=True, eps=1e-5,
                 compute_dtype=jnp.bfloat16, out_dtype=jnp.bfloat16):
    """PyTorch-style NCHW interface (demo only; keep NHWC between layers in a real network)."""
    x_nhwc = jnp.transpose(x_nchw, (0, 2, 3, 1))
    y = basic_conv2d_nhwc(x_nhwc, weight_oihw, gamma, beta, running_mean, running_var,
                          stride=stride, padding=padding, dilation=dilation,
                          need_relu=need_relu, eps=eps,
                          compute_dtype=compute_dtype, out_dtype=out_dtype)
    return jnp.transpose(y, (0, 3, 1, 2))


def _reference(x_nchw, weight_oihw, gamma, beta, running_mean, running_var,
               *, padding, need_relu, eps=1e-5, compute_dtype=jnp.bfloat16):
    # Mirror the kernel's bf16 input rounding (f32 accumulation) for a tight comparison.
    xf = x_nchw.astype(compute_dtype).astype(jnp.float32)
    wf = weight_oihw.astype(compute_dtype).astype(jnp.float32)
    y = jax.lax.conv_general_dilated(
        xf, wf, window_strides=(1, 1),
        padding=[(padding, padding), (padding, padding)],
        dimension_numbers=("NCHW", "OIHW", "NCHW"))
    scale = gamma / jnp.sqrt(running_var + eps)
    shift = beta - running_mean * scale
    y = y * scale[None, :, None, None] + shift[None, :, None, None]
    if need_relu:
        y = jnp.maximum(y, 0.0)
    return y


if __name__ == "__main__":
    def run_case(N, C_in, H, W, C_out, K, PAD):
        key = jax.random.PRNGKey(0)
        kx, kw_, kg, kb, km, kv = jax.random.split(key, 6)
        x = jax.random.normal(kx, (N, C_in, H, W), dtype=jnp.float32)
        w_scale = 0.3 / (K * (C_in ** 0.5))
        weight = jax.random.normal(kw_, (C_out, C_in, K, K), dtype=jnp.float32) * w_scale
        gamma = 1.0 + 0.1 * jax.random.normal(kg, (C_out,), dtype=jnp.float32)
        beta = 0.1 * jax.random.normal(kb, (C_out,), dtype=jnp.float32)
        running_mean = 0.1 * jax.random.normal(km, (C_out,), dtype=jnp.float32)
        running_var = jnp.abs(1.0 + 0.1 * jax.random.normal(kv, (C_out,), dtype=jnp.float32))

        out = basic_conv2d(x, weight, gamma, beta, running_mean, running_var,
                           stride=1, padding=PAD, dilation=1, need_relu=True)
        out = jax.block_until_ready(out)

        H_out = H + 2 * PAD - K + 1
        W_out = W + 2 * PAD - K + 1
        assert out.shape == (N, C_out, H_out, W_out), out.shape

        ref = _reference(x, weight, gamma, beta, running_mean, running_var,
                         padding=PAD, need_relu=True)
        out_f32 = out.astype(jnp.float32)
        max_err = float(jnp.max(jnp.abs(out_f32 - ref)))
        assert jnp.allclose(out_f32, ref, atol=3e-2, rtol=3e-2), \
            f"mismatch vs reference (max abs err {max_err})"

    # Module-consistent small shape: in_channels=4, out_channels=8, kernel_size=3, padding=1.
    # Exercises the tiny-C_in (KW-folded) path with an even H_out.
    run_case(N=2, C_in=4, H=16, W=16, C_out=8, K=3, PAD=1)
    # Larger-C_in (un-folded) path with odd H_out (exercises row-tile padding).
    run_case(N=1, C_in=64, H=7, W=7, C_out=16, K=3, PAD=1)

    # TODO(synk): PyTorch BatchNorm2d in training mode uses batch statistics and updates running
    # stats; this kernel implements the standard inference-mode (running-stats) forward only.
    print("KERNEL_OK")
</pallas_src>

<mosaic_0001>
module attributes {stable_mosaic.version = 11 : i64} {
  func.func @_conv_bn_relu_kernel(%arg0: i32, %arg1: i32, %arg2: memref<1x18x16x12xbf16, #tpu.memory_space<vmem>>, %arg3: memref<3x12x128xbf16, #tpu.memory_space<vmem>>, %arg4: memref<1x128xf32, #tpu.memory_space<vmem>>, %arg5: memref<1x128xf32, #tpu.memory_space<vmem>>, %arg6: memref<1x8x16x128xbf16, #tpu.memory_space<vmem>>) attributes {dimension_semantics = [#tpu.dimension_semantics<parallel>, #tpu.dimension_semantics<parallel>], iteration_bounds = array<i64: 2, 2>, scalar_prefetch = 0 : i64, scratch_operands = 0 : i64, tpu.core_type = #tpu.core_type<tc>, window_params = [{transform_indices = @transform_0, window_bounds = array<i64: 1, 18, 16, 12>}, {pipeline_mode = #tpu.pipeline_mode<synchronous>, transform_indices = @transform_1, window_bounds = array<i64: 3, 12, 128>}, {pipeline_mode = #tpu.pipeline_mode<synchronous>, transform_indices = @transform_2, window_bounds = array<i64: 1, 128>}, {pipeline_mode = #tpu.pipeline_mode<synchronous>, transform_indices = @transform_3, window_bounds = array<i64: 1, 128>}, {transform_indices = @transform_4, window_bounds = array<i64: 1, 8, 16, 128>}]} {
    %c8_i32 = arith.constant 8 : i32
    %0 = arith.muli %arg1, %c8_i32 : i32
    %1 = tpu.assume_multiple %0, 8 : i32
    %cst = arith.constant 0.000000e+00 : f32
    %2 = vector.broadcast %cst : f32 to vector<128x128xf32>
    %c0_i32 = arith.constant 0 : i32
    %3 = arith.addi %1, %c0_i32 : i32
    %c0 = arith.constant 0 : index
    %4 = arith.index_cast %3 : i32 to index
    %c0_0 = arith.constant 0 : index
    %c0_1 = arith.constant 0 : index
    %5 = vector.load %arg2[%c0, %4, %c0_0, %c0_1] : memref<1x18x16x12xbf16, #tpu.memory_space<vmem>>, vector<1x8x16x12xbf16>
    %6 = vector.shape_cast %5 : vector<1x8x16x12xbf16> to vector<8x16x12xbf16>
    %7 = vector.shape_cast %6 : vector<8x16x12xbf16> to vector<128x12xbf16>
    %c0_2 = arith.constant 0 : index
    %c0_3 = arith.constant 0 : index
    %c0_4 = arith.constant 0 : index
    %8 = vector.load %arg3[%c0_2, %c0_3, %c0_4] : memref<3x12x128xbf16, #tpu.memory_space<vmem>>, vector<1x12x128xbf16>
    %9 = vector.shape_cast %8 : vector<1x12x128xbf16> to vector<12x128xbf16>
    %cst_5 = arith.constant dense<0.000000e+00> : vector<128x128xf32>
    %10 = tpu.matmul %7, %9, %cst_5 {dimension_numbers = #tpu.dot_dimension_numbers<[1], [0], [0], [1], [0, 0, 1, 1], [], []>} : vector<128x12xbf16>, vector<12x128xbf16>, vector<128x128xf32> -> vector<128x128xf32>
    %11 = arith.addf %2, %10 : vector<128x128xf32>
    %c1_i32 = arith.constant 1 : i32
    %12 = arith.addi %1, %c1_i32 : i32
    %c0_6 = arith.constant 0 : index
    %13 = arith.index_cast %12 : i32 to index
    %c0_7 = arith.constant 0 : index
    %c0_8 = arith.constant 0 : index
    %14 = vector.load %arg2[%c0_6, %13, %c0_7, %c0_8] : memref<1x18x16x12xbf16, #tpu.memory_space<vmem>>, vector<1x8x16x12xbf16>
    %15 = vector.shape_cast %14 : vector<1x8x16x12xbf16> to vector<8x16x12xbf16>
    %16 = vector.shape_cast %15 : vector<8x16x12xbf16> to vector<128x12xbf16>
    %c1 = arith.constant 1 : index
    %c0_9 = arith.constant 0 : index
    %c0_10 = arith.constant 0 : index
    %17 = vector.load %arg3[%c1, %c0_9, %c0_10] : memref<3x12x128xbf16, #tpu.memory_space<vmem>>, vector<1x12x128xbf16>
    %18 = vector.shape_cast %17 : vector<1x12x128xbf16> to vector<12x128xbf16>
    %cst_11 = arith.constant dense<0.000000e+00> : vector<128x128xf32>
    %19 = tpu.matmul %16, %18, %cst_11 {dimension_numbers = #tpu.dot_dimension_numbers<[1], [0], [0], [1], [0, 0, 1, 1], [], []>} : vector<128x12xbf16>, vector<12x128xbf16>, vector<128x128xf32> -> vector<128x128xf32>
    %20 = arith.addf %11, %19 : vector<128x128xf32>
    %c2_i32 = arith.constant 2 : i32
    %21 = arith.addi %1, %c2_i32 : i32
    %c0_12 = arith.constant 0 : index
    %22 = arith.index_cast %21 : i32 to index
    %c0_13 = arith.constant 0 : index
    %c0_14 = arith.constant 0 : index
    %23 = vector.load %arg2[%c0_12, %22, %c0_13, %c0_14] : memref<1x18x16x12xbf16, #tpu.memory_space<vmem>>, vector<1x8x16x12xbf16>
    %24 = vector.shape_cast %23 : vector<1x8x16x12xbf16> to vector<8x16x12xbf16>
    %25 = vector.shape_cast %24 : vector<8x16x12xbf16> to vector<128x12xbf16>
    %c2 = arith.constant 2 : index
    %c0_15 = arith.constant 0 : index
    %c0_16 = arith.constant 0 : index
    %26 = vector.load %arg3[%c2, %c0_15, %c0_16] : memref<3x12x128xbf16, #tpu.memory_space<vmem>>, vector<1x12x128xbf16>
    %27 = vector.shape_cast %26 : vector<1x12x128xbf16> to vector<12x128xbf16>
    %cst_17 = arith.constant dense<0.000000e+00> : vector<128x128xf32>
    %28 = tpu.matmul %25, %27, %cst_17 {dimension_numbers = #tpu.dot_dimension_numbers<[1], [0], [0], [1], [0, 0, 1, 1], [], []>} : vector<128x12xbf16>, vector<12x128xbf16>, vector<128x128xf32> -> vector<128x128xf32>
    %29 = arith.addf %20, %28 : vector<128x128xf32>
    %c0_18 = arith.constant 0 : index
    %c0_19 = arith.constant 0 : index
    %30 = vector.load %arg4[%c0_18, %c0_19] : memref<1x128xf32, #tpu.memory_space<vmem>>, vector<1x128xf32>
    %31 = vector.shape_cast %30 : vector<1x128xf32> to vector<128xf32>
    %32 = vector.shape_cast %31 : vector<128xf32> to vector<1x128xf32>
    %33 = vector.broadcast %32 : vector<1x128xf32> to vector<128x128xf32>
    %34 = arith.mulf %29, %33 : vector<128x128xf32>
    %c0_20 = arith.constant 0 : index
    %c0_21 = arith.constant 0 : index
    %35 = vector.load %arg5[%c0_20, %c0_21] : memref<1x128xf32, #tpu.memory_space<vmem>>, vector<1x128xf32>
    %36 = vector.shape_cast %35 : vector<1x128xf32> to vector<128xf32>
    %37 = vector.shape_cast %36 : vector<128xf32> to vector<1x128xf32>
    %38 = vector.broadcast %37 : vector<1x128xf32> to vector<128x128xf32>
    %39 = arith.addf %34, %38 : vector<128x128xf32>
    %cst_22 = arith.constant 0.000000e+00 : f32
    %40 = vector.broadcast %cst_22 : f32 to vector<128x128xf32>
    %41 = arith.maximumf %39, %40 : vector<128x128xf32>
    %42 = vector.shape_cast %41 : vector<128x128xf32> to vector<8x16x128xf32>
    %43 = arith.truncf %42 : vector<8x16x128xf32> to vector<8x16x128xbf16>
    %c0_23 = arith.constant 0 : index
    %c0_24 = arith.constant 0 : index
    %c0_25 = arith.constant 0 : index
    %c0_26 = arith.constant 0 : index
    %44 = vector.load %arg6[%c0_23, %c0_24, %c0_25, %c0_26] : memref<1x8x16x128xbf16, #tpu.memory_space<vmem>>, vector<1x8x16x128xbf16>
    %45 = vector.shape_cast %44 : vector<1x8x16x128xbf16> to vector<8x16x128xbf16>
    %46 = vector.shape_cast %43 : vector<8x16x128xbf16> to vector<1x8x16x128xbf16>
    tpu.vector_store %arg6[%c0_23, %c0_24, %c0_25, %c0_26], %46 {strides = array<i32>} : memref<1x8x16x128xbf16, #tpu.memory_space<vmem>>, vector<1x8x16x128xbf16>,
    return
  }
  func.func @transform_0(%arg0: i32, %arg1: i32) -> (i32, i32, i32, i32) {
    %c0_i32 = arith.constant 0 : i32
    %c0_i32_0 = arith.constant 0 : i32
    %c0_i32_1 = arith.constant 0 : i32
    %c0_i32_2 = arith.constant 0 : i32
    return %arg0, %c0_i32, %c0_i32_0, %c0_i32_1 : i32, i32, i32, i32
  }
  func.func @transform_1(%arg0: i32, %arg1: i32) -> (i32, i32, i32) {
    %c0_i32 = arith.constant 0 : i32
    %c0_i32_0 = arith.constant 0 : i32
    %c0_i32_1 = arith.constant 0 : i32
    %c0_i32_2 = arith.constant 0 : i32
    return %c0_i32, %c0_i32_0, %c0_i32_1 : i32, i32, i32
  }
  func.func @transform_2(%arg0: i32, %arg1: i32) -> (i32, i32) {
    %c0_i32 = arith.constant 0 : i32
    %c0_i32_0 = arith.constant 0 : i32
    %c0_i32_1 = arith.constant 0 : i32
    return %c0_i32, %c0_i32_0 : i32, i32
  }
  func.func @transform_3(%arg0: i32, %arg1: i32) -> (i32, i32) {
    %c0_i32 = arith.constant 0 : i32
    %c0_i32_0 = arith.constant 0 : i32
    %c0_i32_1 = arith.constant 0 : i32
    return %c0_i32, %c0_i32_0 : i32, i32
  }
  func.func @transform_4(%arg0: i32, %arg1: i32) -> (i32, i32, i32, i32) {
    %c0_i32 = arith.constant 0 : i32
    %c0_i32_0 = arith.constant 0 : i32
    %c0_i32_1 = arith.constant 0 : i32
    return %arg0, %arg1, %c0_i32, %c0_i32_0 : i32, i32, i32, i32
  }
}

</mosaic_0001>

<llo_original>
// kernel: tpu_custom_call.1
$region0: #{tpu_custom_call.1}
  #allocation0 [shape = 'u32[]', space=smem, size = 0x4, offset = 0x4, fixed_abs, tag = 'smem constant byte address 0x4 - core index']
  #allocation1 [shape = 'u32[144,128]{1,0:T(1,128)}', space=vmem, size = 0x12000, scoped, tag = 'internal scratch']
  %s0 = inlined_call_operand.vmem [shape: bf16[2,18,16,12], index: 0, kind: input, shape index: {}]
  %s1 = inlined_call_operand.vmem [shape: bf16[3,12,128], index: 1, kind: input, shape index: {}]
  %s2 = inlined_call_operand.vmem [shape: f32[1,128], index: 2, kind: input, shape index: {}]
  %s3 = inlined_call_operand.vmem [shape: f32[1,128], index: 3, kind: input, shape index: {}]
  %s4 = inlined_call_operand.hbm [shape: bf16[2,16,16,128], index: 4, kind: output, shape index: {}]
  %s5 = sld [smem:[#allocation0]]
  $region49: #{tpu_custom_call.1} parent=0
    _
  %s7 = ssub.s32 1, %s5
  %s8 = scalar_select 0, %s7, %s5
  $region1: #{tpu_custom_call.1} parent=0
    #allocation2 [shape = 'u8[65536]{0}', space=vmem, size = 0x10000, scoped, tag = 'output window, operand 0']
    #allocation3 [shape = 's32[2]{0}', space=sflag, size = 0x8, scoped, tag = 'scoped memory for tpu_custom_call.1']
    %9 = vsyncpa [#allocation3], 0
    %s10 = scalar_lea.sflag [#allocation3], 1
    %11 = vsyncpa %s10, 0
    loop: start=0, step=1, limit=6
    $region2: #{tpu_custom_call.1} parent=1 // loop_pre_header
      _
    $region3: #{tpu_custom_call.1} parent=1 // loop_header
      %s13 = sphi 0, %s17
      %p14 = scmp.ge.s32.totalorder %s13, 6
      %s20 = sphi 0, %s32
      %s21 = sphi 0, %s28
      %s22 = sphi 0, %s20
      %s23 = sphi 0, %s21
      %s24 = sphi 0, %s22
      %s25 = sphi 0, %s23
      %s35 = sphi 0, %s37
      %s38 = sphi 0, %s35
      %s39 = sphi 0, %s38
      %s55 = sphi 0, %s39
      %s59 = sphi 0, %s59
      %s61 = sphi 0, %s59
      %s62 = sphi 0, %s61
      %s76 = sphi 0, %s62
      %s80 = sphi 0, %s80
      %s82 = sphi 0, %s80
      %s83 = sphi 0, %s82
      %s97 = sphi 0, %s83
      %s101 = sphi 0, %s101
      %s103 = sphi 0, %s101
      %s104 = sphi 0, %s103
      %s118 = sphi 0, %s104
      %s126 = sphi 0, %s128
      %s129 = sphi 0, %s126
      %s130 = sphi 0, %s129
      %s146 = sphi 0, %s130
    $region4: #{tpu_custom_call.1} parent=1 // loop_header_branch
      %16 = sbr.rel (%p14) target = $region8
    $region5: #{tpu_custom_call.1} parent=1 // loop_body
      %s18 = ssub.s32 %s13, 1
      %s19 = ssub.s32 %s13, 2
      %s26 = sadd.s32 1, %s21
      %p27 = scmp.ge.s32.totalorder %s26, 2
      %s28 = scalar_select %p27, 0, %s26
      %s29 = sadd.s32 1, %s20
      %s30 = scalar_select %p27, %s29, %s20
      %p31 = scmp.ge.s32.totalorder %s30, 2
      %s32 = scalar_select %p31, 0, %s30
      %s33 = ssub.s32 %s20, %s32
      %p34 = scmp.eq.s32.totalorder %s33, 0
      %s36 = sadd.s32 %s35, 1
      %s37 = scalar_select %p34, %s35, %s36
      %p40 = pneg %p34
      %p41 = scmp.eq.s32.totalorder %s13, 3
      %p42 = por %p40, %p41
      %p43 = scmp.ne.s32.totalorder %s35, %s38
      %p44 = scmp.eq.s32.totalorder %s13, 0
      %p45 = por %p43, %p44
      %p46 = scmp.ne.s32.totalorder %s35, %s38
      %p47 = scmp.eq.s32.totalorder %s18, 3
      %p48 = por %p46, %p47
      %p49 = scmp.ne.s32.totalorder %s38, %s39
      %p50 = scmp.eq.s32.totalorder %s18, 0
      %p51 = por %p49, %p50
      %p52 = scmp.ne.s32.totalorder %s38, %s39
      %p53 = scmp.eq.s32.totalorder %s19, 3
      %p54 = por %p52, %p53
      %p56 = scmp.ne.s32.totalorder %s39, %s55
      %p57 = scmp.eq.s32.totalorder %s19, 0
      %p58 = por %p56, %p57
      %s60 = sadd.s32 %s59, 1
      %p63 = scmp.eq.s32.totalorder %s13, 3
      %p64 = scmp.ne.s32.totalorder %s59, %s61
      %p65 = scmp.eq.s32.totalorder %s13, 0
      %p66 = por %p64, %p65
      %p67 = scmp.ne.s32.totalorder %s59, %s61
      %p68 = scmp.eq.s32.totalorder %s18, 3
      %p69 = por %p67, %p68
      %p70 = scmp.ne.s32.totalorder %s61, %s62
      %p71 = scmp.eq.s32.totalorder %s18, 0
      %p72 = por %p70, %p71
      %p73 = scmp.ne.s32.totalorder %s61, %s62
      %p74 = scmp.eq.s32.totalorder %s19, 3
      %p75 = por %p73, %p74
      %p77 = scmp.ne.s32.totalorder %s62, %s76
      %p78 = scmp.eq.s32.totalorder %s19, 0
      %p79 = por %p77, %p78
      %s81 = sadd.s32 %s80, 1
      %p84 = scmp.eq.s32.totalorder %s13, 3
      %p85 = scmp.ne.s32.totalorder %s80, %s82
      %p86 = scmp.eq.s32.totalorder %s13, 0
      %p87 = por %p85, %p86
      %p88 = scmp.ne.s32.totalorder %s80, %s82
      %p89 = scmp.eq.s32.totalorder %s18, 3
      %p90 = por %p88, %p89
      %p91 = scmp.ne.s32.totalorder %s82, %s83
      %p92 = scmp.eq.s32.totalorder %s18, 0
      %p93 = por %p91, %p92
      %p94 = scmp.ne.s32.totalorder %s82, %s83
      %p95 = scmp.eq.s32.totalorder %s19, 3
      %p96 = por %p94, %p95
      %p98 = scmp.ne.s32.totalorder %s83, %s97
      %p99 = scmp.eq.s32.totalorder %s19, 0
      %p100 = por %p98, %p99
      %s102 = sadd.s32 %s101, 1
      %p105 = scmp.eq.s32.totalorder %s13, 3
      %p106 = scmp.ne.s32.totalorder %s101, %s103
      %p107 = scmp.eq.s32.totalorder %s13, 0
      %p108 = por %p106, %p107
      %p109 = scmp.ne.s32.totalorder %s101, %s103
      %p110 = scmp.eq.s32.totalorder %s18, 3
      %p111 = por %p109, %p110
      %p112 = scmp.ne.s32.totalorder %s103, %s104
      %p113 = scmp.eq.s32.totalorder %s18, 0
      %p114 = por %p112, %p113
      %p115 = scmp.ne.s32.totalorder %s103, %s104
      %p116 = scmp.eq.s32.totalorder %s19, 3
      %p117 = por %p115, %p116
      %p119 = scmp.ne.s32.totalorder %s104, %s118
      %p120 = scmp.eq.s32.totalorder %s19, 0
      %p121 = por %p119, %p120
      %s122 = ssub.s32 %s20, %s32
      %s123 = ssub.s32 %s21, %s28
      %s124 = sor.u32 %s122, %s123
      %p125 = scmp.eq.s32.totalorder %s124, 0
      %s127 = sadd.s32 %s126, 1
      %s128 = scalar_select %p125, %s126, %s127
      %p131 = pneg %p125
      %p132 = scmp.eq.s32.totalorder %s13, 3
      %p133 = por %p131, %p132
      %p134 = scmp.ne.s32.totalorder %s126, %s129
      %p135 = scmp.eq.s32.totalorder %s13, 0
      %p136 = por %p134, %p135
      %p137 = scmp.ne.s32.totalorder %s126, %s129
      %p138 = scmp.eq.s32.totalorder %s18, 3
      %p139 = por %p137, %p138
      %p140 = scmp.ne.s32.totalorder %s129, %s130
      %p141 = scmp.eq.s32.totalorder %s18, 0
      %p142 = por %p140, %p141
      %p143 = scmp.ne.s32.totalorder %s129, %s130
      %p144 = scmp.eq.s32.totalorder %s19, 3
      %p145 = por %p143, %p144
      %p147 = scmp.ne.s32.totalorder %s130, %s146
      %p148 = scmp.eq.s32.totalorder %s19, 0
      %p149 = por %p147, %p148
      %p150 = scmp.le.s32.totalorder 1, %s13
      %p151 = scmp.lt.s32.totalorder %s13, 5
      %p152 = pnand %p150, %p151
      %p153 = pneg %p152
      // Predicated region
      $region9: #{tpu_custom_call.1} parent=5 // pred_check
        _
      $region10: #{tpu_custom_call.1} parent=5 // pred_check_branch
        %155 = sbr.rel (%p152) target = $region12
      $region11: #{tpu_custom_call.1} parent=5 // pred_region
        %s156 = ssub.s32 %s13, 1
        // Predicated region
        $region13: #{tpu_custom_call.1} parent=11 // pred_check
          %p157 = pneg %p72
        $region14: #{tpu_custom_call.1} parent=11 // pred_check_branch
          %159 = sbr.rel (%p157) target = $region16
        $region15: #{tpu_custom_call.1} parent=11 // pred_region
          _
        $region16: #{tpu_custom_call.1} parent=11 // pred_fallthru
          _
        // Predicated region
        $region17: #{tpu_custom_call.1} parent=11 // pred_check
          %p160 = pneg %p93
        $region18: #{tpu_custom_call.1} parent=11 // pred_check_branch
          %162 = sbr.rel (%p160) target = $region20
        $region19: #{tpu_custom_call.1} parent=11 // pred_region
          _
        $region20: #{tpu_custom_call.1} parent=11 // pred_fallthru
          _
        // Predicated region
        $region21: #{tpu_custom_call.1} parent=11 // pred_check
          %p163 = pneg %p114
        $region22: #{tpu_custom_call.1} parent=11 // pred_check_branch
          %165 = sbr.rel (%p163) target = $region24
        $region23: #{tpu_custom_call.1} parent=11 // pred_region
          _
        $region24: #{tpu_custom_call.1} parent=11 // pred_fallthru
          _
      $region12: #{tpu_custom_call.1} parent=5 // pred_fallthru
        _
      %p166 = scmp.lt.s32.totalorder %s13, 4
      // Predicated region
      $region25: #{tpu_custom_call.1} parent=5 // pred_check
        %p167 = pneg %p166
      $region26: #{tpu_custom_call.1} parent=5 // pred_check_branch
        %169 = sbr.rel (%p167) target = $region28
      $region27: #{tpu_custom_call.1} parent=5 // pred_region
        // Predicated region
        $region29: #{tpu_custom_call.1} parent=27 // pred_check
          %p170 = pneg %p45
        $region30: #{tpu_custom_call.1} parent=27 // pred_check_branch
          %172 = sbr.rel (%p170) target = $region32
        $region31: #{tpu_custom_call.1} parent=27 // pred_region
          %p173 = scmp.lt.s32.totalorder %s20, 1
          %s174 = scalar_select %p173, %s20, 1
          %s175 = smul.addr %s174, 36
          %s176 = smul.addr %s175, 4
          %s177 = scalar_lea.vmem %s0, %s176
        $region32: #{tpu_custom_call.1} parent=27 // pred_fallthru
          _
      $region28: #{tpu_custom_call.1} parent=5 // pred_fallthru
        _
      %p178 = scmp.le.s32.totalorder 1, %s13
      %p179 = scmp.lt.s32.totalorder %s13, 5
      %p180 = pnand %p178, %p179
      %p181 = pneg %p180
      // Predicated region
      $region33: #{tpu_custom_call.1} parent=5 // pred_check
        _
      $region34: #{tpu_custom_call.1} parent=5 // pred_check_branch
        %183 = sbr.rel (%p180) target = $region36
      $region35: #{tpu_custom_call.1} parent=5 // pred_region
        %s184 = ssub.s32 %s13, 1
        %p185 = scmp.lt.s32.totalorder %s22, 1
        %s186 = scalar_select %p185, %s22, 1
        %s187 = smul.addr %s186, 36
        %s188 = smul.addr %s187, 4
        %s189 = scalar_lea.vmem %s0, %s188
        %p190 = pneg %p51
        %p191 = pneg %p48
        %p192 = pneg %p72
        %p193 = pneg %p69
        %p194 = pneg %p93
        %p195 = pneg %p90
        %p196 = pneg %p114
        %p197 = pneg %p111
        %p198 = pneg %p142
        %p199 = pneg %p139
        %s200 = sand.u32 %s129, 1
        %s201 = scalar_lea.sflag [#allocation3], %s200
        %s202 = sand.u32 %s129, 1
        %s203 = smul.addr %s202, 64
        %s204 = scalar_lea.vmem [#allocation2], %s203
        %p205 = scmp.lt.s32.totalorder %s22, 1
        %s206 = scalar_select %p205, %s22, 1
        %s207 = smul.addr %s206, 36
        %s208 = smul.addr %s207, 4
        %s209 = scalar_lea.vmem %s0, %s208
        %s210 = smul.u32 8, %s23
        %s212 = smul.u32 %s23, 8
        %s213 = smul.u32 %s212, 2
        %s214 = smul.addr %s213, 4
        %s215 = scalar_lea.vmem %s209, %s214
        %v216 = vld [vmem:[%s215] sm:$0xf]
        %v217 = vld [vmem:[%s215 + $0x4] sm:$0xf]
        %v218 = vld [vmem:[%s215 + $0x8] sm:$0xf]
        %v219 = vld [vmem:[%s215 + $0xc] sm:$0xf]
        %v220 = vld [vmem:[%s215 + $0x10] sm:$0xf]
        %v221 = vld [vmem:[%s215 + $0x14] sm:$0xf]
        %v222 = vld [vmem:[%s215 + $0x18] sm:$0xf]
        %v223 = vld [vmem:[%s215 + $0x1c] sm:$0xf]
        %v224 = vld [vmem:[%s215 + $0x20] sm:$0xf]
        %v225 = vld [vmem:[%s215 + $0x24] sm:$0xf]
        %v226 = vld [vmem:[%s215 + $0x28] sm:$0xf]
        %v227 = vld [vmem:[%s215 + $0x2c] sm:$0xf]
        %v228 = vld [vmem:[%s215 + $0x30] sm:$0xf]
        %v229 = vld [vmem:[%s215 + $0x34] sm:$0xf]
        %v230 = vld [vmem:[%s215 + $0x38] sm:$0xf]
        %v231 = vld [vmem:[%s215 + $0x3c] sm:$0xf]
        %v232 = vld [vmem:[%s1] sm:$0xf]
        %v233 = vld [vmem:[%s1 + $0x4] sm:$0x3]
        %s234 = sadd.s32 %s212, 1
        %s235 = smul.u32 %s234, 2
        %s236 = smul.addr %s235, 4
        %s237 = scalar_lea.vmem %s209, %s236
        %v238 = vld [vmem:[%s237] sm:$0xf]
        %v239 = vld [vmem:[%s237 + $0x4] sm:$0xf]
        %v240 = vld [vmem:[%s237 + $0x8] sm:$0xf]
        %v241 = vld [vmem:[%s237 + $0xc] sm:$0xf]
        %v242 = vld [vmem:[%s237 + $0x10] sm:$0xf]
        %v243 = vld [vmem:[%s237 + $0x14] sm:$0xf]
        %v244 = vld [vmem:[%s237 + $0x18] sm:$0xf]
        %v245 = vld [vmem:[%s237 + $0x1c] sm:$0xf]
        %v246 = vld [vmem:[%s237 + $0x20] sm:$0xf]
        %v247 = vld [vmem:[%s237 + $0x24] sm:$0xf]
        %v248 = vld [vmem:[%s237 + $0x28] sm:$0xf]
        %v249 = vld [vmem:[%s237 + $0x2c] sm:$0xf]
        %v250 = vld [vmem:[%s237 + $0x30] sm:$0xf]
        %v251 = vld [vmem:[%s237 + $0x34] sm:$0xf]
        %v252 = vld [vmem:[%s237 + $0x38] sm:$0xf]
        %v253 = vld [vmem:[%s237 + $0x3c] sm:$0xf]
        %s254 = scalar_lea.vmem %s1, 8
        %v255 = vld [vmem:[%s254] sm:$0xf]
        %v256 = vld [vmem:[%s254 + $0x4] sm:$0x3]
        %v273 = vunpack.c.l.b16 %v238
        %v274 = vunpack.c.l.b16 %v239
        %v275 = vunpack.c.l.b16 %v240
        %v276 = vunpack.c.l.b16 %v241
        %v277 = vunpack.c.l.b16 %v242
        %v278 = vunpack.c.l.b16 %v243
        %v279 = vunpack.c.l.b16 %v244
        %v280 = vunpack.c.l.b16 %v245
        %v281 = vunpack.c.l.b16 %v246
        %v282 = vunpack.c.l.b16 %v247
        %v283 = vunpack.c.l.b16 %v248
        %v284 = vunpack.c.l.b16 %v249
        %v285 = vunpack.c.l.b16 %v250
        %v286 = vunpack.c.l.b16 %v251
        %v287 = vunpack.c.l.b16 %v252
        %v288 = vunpack.c.l.b16 %v253
        %v289 = vpack.c.b16 %v274, %v273
        %v290 = vpack.c.b16 %v276, %v275
        %v291 = vpack.c.b16 %v278, %v277
        %v292 = vpack.c.b16 %v280, %v279
        %v293 = vpack.c.b16 %v282, %v281
        %v294 = vpack.c.b16 %v284, %v283
        %v295 = vpack.c.b16 %v286, %v285
        %v296 = vpack.c.b16 %v288, %v287
        %v299 = vunpack.c.l.b16 %v255
        %v300 = vunpack.c.l.b16 %v256
        %v301 = vpack.c.b16 %v300, %v299
        %vm302 = vcmask 97280
        %v304 = vsel %vm302, %v289, 0
        %v307 = vsel %vm302, %v290, 0
        %v310 = vsel %vm302, %v291, 0
        %v313 = vsel %vm302, %v292, 0
        %v316 = vsel %vm302, %v293, 0
        %v319 = vsel %vm302, %v294, 0
        %v322 = vsel %vm302, %v295, 0
        %v325 = vsel %vm302, %v296, 0
        %vm327 = vcmask 1045504
        %v329 = vsel %vm327, %v301, 0
        %331 = vmatprep.subr.bf16.mxu0 0
        %332 = vmatpush1.bf16.msra.mxu0 %v329
        %333 = vmatprep.subr.bf16.mxu0 0
        %334 = vmatpush1.bf16.msra.mxu0 0
        %335 = vmatprep.subr.bf16.mxu0 0
        %336 = vmatpush1.bf16.msra.mxu0 0
        %337 = vmatprep.subr.bf16.mxu0 0
        %338 = vmatpush1.bf16.msra.mxu0 0
        %339 = vmatprep.subr.bf16.mxu0 0
        %340 = vmatpush1.bf16.msra.mxu0 0
        %341 = vmatprep.subr.bf16.mxu0 0
        %342 = vmatpush1.bf16.msra.mxu0 0
        %343 = vmatprep.subr.bf16.mxu0 0
        %344 = vmatpush1.bf16.msra.mxu0 0
        %345 = vmatprep.subr.bf16.mxu0 0
        %346 = vmatpush1.bf16.msra.mxu0 0
        %347 = vmatprep.subr.bf16.mxu0 0
        %348 = vmatpush1.bf16.msra.mxu0 0
        %349 = vmatprep.subr.bf16.mxu0 0
        %350 = vmatpush1.bf16.msra.mxu0 0
        %351 = vmatprep.subr.bf16.mxu0 0
        %352 = vmatpush1.bf16.msra.mxu0 0
        %353 = vmatprep.subr.bf16.mxu0 0
        %354 = vmatpush1.bf16.msra.mxu0 0
        %355 = vmatprep.subr.bf16.mxu0 0
        %356 = vmatpush1.bf16.msra.mxu0 0
        %357 = vmatprep.subr.bf16.mxu0 0
        %358 = vmatpush1.bf16.msra.mxu0 0
        %359 = vmatprep.subr.bf16.mxu0 0
        %360 = vmatpush1.bf16.msra.mxu0 0
        %361 = vmatprep.subr.bf16.mxu0 0
        %362 = vmatpush1.bf16.msra.mxu0 0
        %363 = vmatprep.mubr.bf16.mxu0 0
        %364 = vmatmul.mubr.bf16.gmra.mrb[0].mxu0 %v304
        %v365 = vpop.f32.mrb[0].mxu0
        %v366 = vadd.f32 0.0, %v365
        %v367 = vpop.f32.mrb[0].mxu0
        %v368 = vpop.f32.mrb[0].mxu0
        %v369 = vadd.f32 0.0, %v368
        %v370 = vpop.f32.mrb[0].mxu0
        %371 = vmatprep.mubr.bf16.mxu0 0
        %372 = vmatmul.mubr.bf16.gmra.mrb[0].mxu0 %v307
        %v373 = vpop.f32.mrb[0].mxu0
        %v374 = vadd.f32 0.0, %v373
        %v375 = vpop.f32.mrb[0].mxu0
        %v376 = vpop.f32.mrb[0].mxu0
        %v377 = vadd.f32 0.0, %v376
        %v378 = vpop.f32.mrb[0].mxu0
        %379 = vmatprep.mubr.bf16.mxu0 0
        %380 = vmatmul.mubr.bf16.gmra.mrb[0].mxu0 %v310
        %v381 = vpop.f32.mrb[0].mxu0
        %v382 = vadd.f32 0.0, %v381
        %v383 = vpop.f32.mrb[0].mxu0
        %v384 = vpop.f32.mrb[0].mxu0
        %v385 = vadd.f32 0.0, %v384
        %v386 = vpop.f32.mrb[0].mxu0
        %387 = vmatprep.mubr.bf16.mxu0 0
        %388 = vmatmul.mubr.bf16.gmra.mrb[0].mxu0 %v313
        %v389 = vpop.f32.mrb[0].mxu0
        %v390 = vadd.f32 0.0, %v389
        %v391 = vpop.f32.mrb[0].mxu0
        %v392 = vpop.f32.mrb[0].mxu0
        %v393 = vadd.f32 0.0, %v392
        %v394 = vpop.f32.mrb[0].mxu0
        %395 = vmatprep.mubr.bf16.mxu0 0
        %396 = vmatmul.mubr.bf16.gmra.mrb[0].mxu0 %v316
        %v397 = vpop.f32.mrb[0].mxu0
        %v398 = vadd.f32 0.0, %v397
        %v399 = vpop.f32.mrb[0].mxu0
        %v400 = vpop.f32.mrb[0].mxu0
        %v401 = vadd.f32 0.0, %v400
        %v402 = vpop.f32.mrb[0].mxu0
        %403 = vmatprep.mubr.bf16.mxu0 0
        %404 = vmatmul.mubr.bf16.gmra.mrb[0].mxu0 %v319
        %v405 = vpop.f32.mrb[0].mxu0
        %v406 = vadd.f32 0.0, %v405
        %v407 = vpop.f32.mrb[0].mxu0
        %v408 = vpop.f32.mrb[0].mxu0
        %v409 = vadd.f32 0.0, %v408
        %v410 = vpop.f32.mrb[0].mxu0
        %411 = vmatprep.mubr.bf16.mxu0 0
        %412 = vmatmul.mubr.bf16.gmra.mrb[0].mxu0 %v322
        %v413 = vpop.f32.mrb[0].mxu0
        %v414 = vadd.f32 0.0, %v413
        %v415 = vpop.f32.mrb[0].mxu0
        %v416 = vpop.f32.mrb[0].mxu0
        %v417 = vadd.f32 0.0, %v416
        %v418 = vpop.f32.mrb[0].mxu0
        %419 = vmatprep.mubr.bf16.mxu0 0
        %420 = vmatmul.mubr.bf16.gmra.mrb[0].mxu0 %v325
        %v421 = vpop.f32.mrb[0].mxu0
        %v422 = vadd.f32 0.0, %v421
        %v423 = vpop.f32.mrb[0].mxu0
        %v424 = vpop.f32.mrb[0].mxu0
        %v425 = vadd.f32 0.0, %v424
        %v426 = vpop.f32.mrb[0].mxu0
        %427 = vdwg.mxu0
        %v444 = vunpack.c.l.b16 %v216
        %v445 = vunpack.c.l.b16 %v217
        %v446 = vunpack.c.l.b16 %v218
        %v447 = vunpack.c.l.b16 %v219
        %v448 = vunpack.c.l.b16 %v220
        %v449 = vunpack.c.l.b16 %v221
        %v450 = vunpack.c.l.b16 %v222
        %v451 = vunpack.c.l.b16 %v223
        %v452 = vunpack.c.l.b16 %v224
        %v453 = vunpack.c.l.b16 %v225
        %v454 = vunpack.c.l.b16 %v226
        %v455 = vunpack.c.l.b16 %v227
        %v456 = vunpack.c.l.b16 %v228
        %v457 = vunpack.c.l.b16 %v229
        %v458 = vunpack.c.l.b16 %v230
        %v459 = vunpack.c.l.b16 %v231
        %v460 = vpack.c.b16 %v445, %v444
        %v461 = vpack.c.b16 %v447, %v446
        %v462 = vpack.c.b16 %v449, %v448
        %v463 = vpack.c.b16 %v451, %v450
        %v464 = vpack.c.b16 %v453, %v452
        %v465 = vpack.c.b16 %v455, %v454
        %v466 = vpack.c.b16 %v457, %v456
        %v467 = vpack.c.b16 %v459, %v458
        %v470 = vunpack.c.l.b16 %v232
        %v471 = vunpack.c.l.b16 %v233
        %v472 = vpack.c.b16 %v471, %v470
        %v474 = vsel %vm302, %v460, 0
        %v477 = vsel %vm302, %v461, 0
        %v480 = vsel %vm302, %v462, 0
        %v483 = vsel %vm302, %v463, 0
        %v486 = vsel %vm302, %v464, 0
        %v489 = vsel %vm302, %v465, 0
        %v492 = vsel %vm302, %v466, 0
        %v495 = vsel %vm302, %v467, 0
        %v498 = vsel %vm327, %v472, 0
        %500 = vmatprep.subr.bf16.mxu0 0
        %501 = vmatpush1.bf16.msra.mxu0 %v498
        %502 = vmatprep.subr.bf16.mxu0 0
        %503 = vmatpush1.bf16.msra.mxu0 0
        %504 = vmatprep.subr.bf16.mxu0 0
        %505 = vmatpush1.bf16.msra.mxu0 0
        %506 = vmatprep.subr.bf16.mxu0 0
        %507 = vmatpush1.bf16.msra.mxu0 0
        %508 = vmatprep.subr.bf16.mxu0 0
        %509 = vmatpush1.bf16.msra.mxu0 0
        %510 = vmatprep.subr.bf16.mxu0 0
        %511 = vmatpush1.bf16.msra.mxu0 0
        %512 = vmatprep.subr.bf16.mxu0 0
        %513 = vmatpush1.bf16.msra.mxu0 0
        %514 = vmatprep.subr.bf16.mxu0 0
        %515 = vmatpush1.bf16.msra.mxu0 0
        %516 = vmatprep.subr.bf16.mxu0 0
        %517 = vmatpush1.bf16.msra.mxu0 0
        %518 = vmatprep.subr.bf16.mxu0 0
        %519 = vmatpush1.bf16.msra.mxu0 0
        %520 = vmatprep.subr.bf16.mxu0 0
        %521 = vmatpush1.bf16.msra.mxu0 0
        %522 = vmatprep.subr.bf16.mxu0 0
        %523 = vmatpush1.bf16.msra.mxu0 0
        %524 = vmatprep.subr.bf16.mxu0 0
        %525 = vmatpush1.bf16.msra.mxu0 0
        %526 = vmatprep.subr.bf16.mxu0 0
        %527 = vmatpush1.bf16.msra.mxu0 0
        %528 = vmatprep.subr.bf16.mxu0 0
        %529 = vmatpush1.bf16.msra.mxu0 0
        %530 = vmatprep.subr.bf16.mxu0 0
        %531 = vmatpush1.bf16.msra.mxu0 0
        %532 = vmatprep.mubr.bf16.mxu0 0
        %533 = vmatmul.mubr.bf16.gmra.mrb[0].mxu0 %v474
        %v534 = vpop.f32.mrb[0].mxu0
        %v535 = vadd.f32 %v366, %v534
        %v536 = vpop.f32.mrb[0].mxu0
        %v537 = vpop.f32.mrb[0].mxu0
        %v538 = vadd.f32 %v369, %v537
        %v539 = vpop.f32.mrb[0].mxu0
        %540 = vmatprep.mubr.bf16.mxu0 0
        %541 = vmatmul.mubr.bf16.gmra.mrb[0].mxu0 %v477
        %v542 = vpop.f32.mrb[0].mxu0
        %v543 = vadd.f32 %v374, %v542
        %v544 = vpop.f32.mrb[0].mxu0
        %v545 = vpop.f32.mrb[0].mxu0
        %v546 = vadd.f32 %v377, %v545
        %v547 = vpop.f32.mrb[0].mxu0
        %548 = vmatprep.mubr.bf16.mxu0 0
        %549 = vmatmul.mubr.bf16.gmra.mrb[0].mxu0 %v480
        %v550 = vpop.f32.mrb[0].mxu0
        %v551 = vadd.f32 %v382, %v550
        %v552 = vpop.f32.mrb[0].mxu0
        %v553 = vpop.f32.mrb[0].mxu0
        %v554 = vadd.f32 %v385, %v553
        %v555 = vpop.f32.mrb[0].mxu0
        %556 = vmatprep.mubr.bf16.mxu0 0
        %557 = vmatmul.mubr.bf16.gmra.mrb[0].mxu0 %v483
        %v558 = vpop.f32.mrb[0].mxu0
        %v559 = vadd.f32 %v390, %v558
        %v560 = vpop.f32.mrb[0].mxu0
        %v561 = vpop.f32.mrb[0].mxu0
        %v562 = vadd.f32 %v393, %v561
        %v563 = vpop.f32.mrb[0].mxu0
        %564 = vmatprep.mubr.bf16.mxu0 0
        %565 = vmatmul.mubr.bf16.gmra.mrb[0].mxu0 %v486
        %v566 = vpop.f32.mrb[0].mxu0
        %v567 = vadd.f32 %v398, %v566
        %v568 = vpop.f32.mrb[0].mxu0
        %v569 = vpop.f32.mrb[0].mxu0
        %v570 = vadd.f32 %v401, %v569
        %v571 = vpop.f32.mrb[0].mxu0
        %572 = vmatprep.mubr.bf16.mxu0 0
        %573 = vmatmul.mubr.bf16.gmra.mrb[0].mxu0 %v489
        %v574 = vpop.f32.mrb[0].mxu0
        %v575 = vadd.f32 %v406, %v574
        %v576 = vpop.f32.mrb[0].mxu0
        %v577 = vpop.f32.mrb[0].mxu0
        %v578 = vadd.f32 %v409, %v577
        %v579 = vpop.f32.mrb[0].mxu0
        %580 = vmatprep.mubr.bf16.mxu0 0
        %581 = vmatmul.mubr.bf16.gmra.mrb[0].mxu0 %v492
        %v582 = vpop.f32.mrb[0].mxu0
        %v583 = vadd.f32 %v414, %v582
        %v584 = vpop.f32.mrb[0].mxu0
        %v585 = vpop.f32.mrb[0].mxu0
        %v586 = vadd.f32 %v417, %v585
        %v587 = vpop.f32.mrb[0].mxu0
        %588 = vmatprep.mubr.bf16.mxu0 0
        %589 = vmatmul.mubr.bf16.gmra.mrb[0].mxu0 %v495
        %v590 = vpop.f32.mrb[0].mxu0
        %v591 = vadd.f32 %v422, %v590
        %v592 = vpop.f32.mrb[0].mxu0
        %v593 = vpop.f32.mrb[0].mxu0
        %v594 = vadd.f32 %v425, %v593
        %v595 = vpop.f32.mrb[0].mxu0
        %596 = vdwg.mxu0
        %s597 = sadd.s32 %s212, 2
        %s598 = smul.u32 %s597, 2
        %s599 = smul.addr %s598, 4
        %s600 = scalar_lea.vmem %s209, %s599
        %v601 = vld [vmem:[%s600] sm:$0xf]
        %v602 = vld [vmem:[%s600 + $0x4] sm:$0xf]
        %v603 = vld [vmem:[%s600 + $0x8] sm:$0xf]
        %v604 = vld [vmem:[%s600 + $0xc] sm:$0xf]
        %v605 = vld [vmem:[%s600 + $0x10] sm:$0xf]
        %v606 = vld [vmem:[%s600 + $0x14] sm:$0xf]
        %v607 = vld [vmem:[%s600 + $0x18] sm:$0xf]
        %v608 = vld [vmem:[%s600 + $0x1c] sm:$0xf]
        %v609 = vld [vmem:[%s600 + $0x20] sm:$0xf]
        %v610 = vld [vmem:[%s600 + $0x24] sm:$0xf]
        %v611 = vld [vmem:[%s600 + $0x28] sm:$0xf]
        %v612 = vld [vmem:[%s600 + $0x2c] sm:$0xf]
        %v613 = vld [vmem:[%s600 + $0x30] sm:$0xf]
        %v614 = vld [vmem:[%s600 + $0x34] sm:$0xf]
        %v615 = vld [vmem:[%s600 + $0x38] sm:$0xf]
        %v616 = vld [vmem:[%s600 + $0x3c] sm:$0xf]
        %s617 = scalar_lea.vmem %s1, 16
        %v618 = vld [vmem:[%s617] sm:$0xf]
        %v619 = vld [vmem:[%s617 + $0x4] sm:$0x3]
        %v636 = vunpack.c.l.b16 %v601
        %v637 = vunpack.c.l.b16 %v602
        %v638 = vunpack.c.l.b16 %v603
        %v639 = vunpack.c.l.b16 %v604
        %v640 = vunpack.c.l.b16 %v605
        %v641 = vunpack.c.l.b16 %v606
        %v642 = vunpack.c.l.b16 %v607
        %v643 = vunpack.c.l.b16 %v608
        %v644 = vunpack.c.l.b16 %v609
        %v645 = vunpack.c.l.b16 %v610
        %v646 = vunpack.c.l.b16 %v611
        %v647 = vunpack.c.l.b16 %v612
        %v648 = vunpack.c.l.b16 %v613
        %v649 = vunpack.c.l.b16 %v614
        %v650 = vunpack.c.l.b16 %v615
        %v651 = vunpack.c.l.b16 %v616
        %v652 = vpack.c.b16 %v637, %v636
        %v653 = vpack.c.b16 %v639, %v638
        %v654 = vpack.c.b16 %v641, %v640
        %v655 = vpack.c.b16 %v643, %v642
        %v656 = vpack.c.b16 %v645, %v644
        %v657 = vpack.c.b16 %v647, %v646
        %v658 = vpack.c.b16 %v649, %v648
        %v659 = vpack.c.b16 %v651, %v650
        %v662 = vunpack.c.l.b16 %v618
        %v663 = vunpack.c.l.b16 %v619
        %v664 = vpack.c.b16 %v663, %v662
        %v666 = vsel %vm302, %v652, 0
        %v669 = vsel %vm302, %v653, 0
        %v672 = vsel %vm302, %v654, 0
        %v675 = vsel %vm302, %v655, 0
        %v678 = vsel %vm302, %v656, 0
        %v681 = vsel %vm302, %v657, 0
        %v684 = vsel %vm302, %v658, 0
        %v687 = vsel %vm302, %v659, 0
        %v690 = vsel %vm327, %v664, 0
        %692 = vmatprep.subr.bf16.mxu0 0
        %693 = vmatpush1.bf16.msra.mxu0 %v690
        %694 = vmatprep.subr.bf16.mxu0 0
        %695 = vmatpush1.bf16.msra.mxu0 0
        %696 = vmatprep.subr.bf16.mxu0 0
        %697 = vmatpush1.bf16.msra.mxu0 0
        %698 = vmatprep.subr.bf16.mxu0 0
        %699 = vmatpush1.bf16.msra.mxu0 0
        %700 = vmatprep.subr.bf16.mxu0 0
        %701 = vmatpush1.bf16.msra.mxu0 0
        %702 = vmatprep.subr.bf16.mxu0 0
        %703 = vmatpush1.bf16.msra.mxu0 0
        %704 = vmatprep.subr.bf16.mxu0 0
        %705 = vmatpush1.bf16.msra.mxu0 0
        %706 = vmatprep.subr.bf16.mxu0 0
        %707 = vmatpush1.bf16.msra.mxu0 0
        %708 = vmatprep.subr.bf16.mxu0 0
        %709 = vmatpush1.bf16.msra.mxu0 0
        %710 = vmatprep.subr.bf16.mxu0 0
        %711 = vmatpush1.bf16.msra.mxu0 0
        %712 = vmatprep.subr.bf16.mxu0 0
        %713 = vmatpush1.bf16.msra.mxu0 0
        %714 = vmatprep.subr.bf16.mxu0 0
        %715 = vmatpush1.bf16.msra.mxu0 0
        %716 = vmatprep.subr.bf16.mxu0 0
        %717 = vmatpush1.bf16.msra.mxu0 0
        %718 = vmatprep.subr.bf16.mxu0 0
        %719 = vmatpush1.bf16.msra.mxu0 0
        %720 = vmatprep.subr.bf16.mxu0 0
        %721 = vmatpush1.bf16.msra.mxu0 0
        %722 = vmatprep.subr.bf16.mxu0 0
        %723 = vmatpush1.bf16.msra.mxu0 0
        %724 = vmatprep.mubr.bf16.mxu0 0
        %725 = vmatmul.mubr.bf16.gmra.mrb[0].mxu0 %v666
        %v726 = vpop.f32.mrb[0].mxu0
        %v727 = vadd.f32 0.0, %v726
        %v728 = vpop.f32.mrb[0].mxu0
        %v729 = vpop.f32.mrb[0].mxu0
        %v730 = vadd.f32 0.0, %v729
        %v731 = vpop.f32.mrb[0].mxu0
        %732 = vmatprep.mubr.bf16.mxu0 0
        %733 = vmatmul.mubr.bf16.gmra.mrb[0].mxu0 %v669
        %v734 = vpop.f32.mrb[0].mxu0
        %v735 = vadd.f32 0.0, %v734
        %v736 = vpop.f32.mrb[0].mxu0
        %v737 = vpop.f32.mrb[0].mxu0
        %v738 = vadd.f32 0.0, %v737
        %v739 = vpop.f32.mrb[0].mxu0
        %740 = vmatprep.mubr.bf16.mxu0 0
        %741 = vmatmul.mubr.bf16.gmra.mrb[0].mxu0 %v672
        %v742 = vpop.f32.mrb[0].mxu0
        %v743 = vadd.f32 0.0, %v742
        %v744 = vpop.f32.mrb[0].mxu0
        %v745 = vpop.f32.mrb[0].mxu0
        %v746 = vadd.f32 0.0, %v745
        %v747 = vpop.f32.mrb[0].mxu0
        %748 = vmatprep.mubr.bf16.mxu0 0
        %749 = vmatmul.mubr.bf16.gmra.mrb[0].mxu0 %v675
        %v750 = vpop.f32.mrb[0].mxu0
        %v751 = vadd.f32 0.0, %v750
        %v752 = vpop.f32.mrb[0].mxu0
        %v753 = vpop.f32.mrb[0].mxu0
        %v754 = vadd.f32 0.0, %v753
        %v755 = vpop.f32.mrb[0].mxu0
        %756 = vmatprep.mubr.bf16.mxu0 0
        %757 = vmatmul.mubr.bf16.gmra.mrb[0].mxu0 %v678
        %v758 = vpop.f32.mrb[0].mxu0
        %v759 = vadd.f32 0.0, %v758
        %v760 = vpop.f32.mrb[0].mxu0
        %v761 = vpop.f32.mrb[0].mxu0
        %v762 = vadd.f32 0.0, %v761
        %v763 = vpop.f32.mrb[0].mxu0
        %764 = vmatprep.mubr.bf16.mxu0 0
        %765 = vmatmul.mubr.bf16.gmra.mrb[0].mxu0 %v681
        %v766 = vpop.f32.mrb[0].mxu0
        %v767 = vadd.f32 0.0, %v766
        %v768 = vpop.f32.mrb[0].mxu0
        %v769 = vpop.f32.mrb[0].mxu0
        %v770 = vadd.f32 0.0, %v769
        %v771 = vpop.f32.mrb[0].mxu0
        %772 = vmatprep.mubr.bf16.mxu0 0
        %773 = vmatmul.mubr.bf16.gmra.mrb[0].mxu0 %v684
        %v774 = vpop.f32.mrb[0].mxu0
        %v775 = vadd.f32 0.0, %v774
        %v776 = vpop.f32.mrb[0].mxu0
        %v777 = vpop.f32.mrb[0].mxu0
        %v778 = vadd.f32 0.0, %v777
        %v779 = vpop.f32.mrb[0].mxu0
        %780 = vmatprep.mubr.bf16.mxu0 0
        %781 = vmatmul.mubr.bf16.gmra.mrb[0].mxu0 %v687
        %v782 = vpop.f32.mrb[0].mxu0
        %v783 = vadd.f32 0.0, %v782
        %v784 = vpop.f32.mrb[0].mxu0
        %v785 = vpop.f32.mrb[0].mxu0
        %v786 = vadd.f32 0.0, %v785
        %v787 = vpop.f32.mrb[0].mxu0
        %788 = vdwg.mxu0
        %v789 = vadd.f32 %v535, %v727
        %v790 = vadd.f32 %v538, %v730
        %v791 = vadd.f32 %v543, %v735
        %v792 = vadd.f32 %v546, %v738
        %v793 = vadd.f32 %v551, %v743
        %v794 = vadd.f32 %v554, %v746
        %v795 = vadd.f32 %v559, %v751
        %v796 = vadd.f32 %v562, %v754
        %v797 = vadd.f32 %v567, %v759
        %v798 = vadd.f32 %v570, %v762
        %v799 = vadd.f32 %v575, %v767
        %v800 = vadd.f32 %v578, %v770
        %v801 = vadd.f32 %v583, %v775
        %v802 = vadd.f32 %v586, %v778
        %v803 = vadd.f32 %v591, %v783
        %v804 = vadd.f32 %v594, %v786
        %v805 = vld [vmem:[%s2] sm:$0x1]
        %v807 = vlaneseq
        %v808 = vshrl.u32 %v807, 7
        %v809 = vsub.s32 0, %v808
        %v810 = vrot.slane %v805, %v809
        %v812 = vmul.f32 %v789, %v810
        %v813 = vmul.f32 %v790, %v810
        %v814 = vmul.f32 %v791, %v810
        %v815 = vmul.f32 %v792, %v810
        %v816 = vmul.f32 %v793, %v810
        %v817 = vmul.f32 %v794, %v810
        %v818 = vmul.f32 %v795, %v810
        %v819 = vmul.f32 %v796, %v810
        %v820 = vmul.f32 %v797, %v810
        %v821 = vmul.f32 %v798, %v810
        %v822 = vmul.f32 %v799, %v810
        %v823 = vmul.f32 %v800, %v810
        %v824 = vmul.f32 %v801, %v810
        %v825 = vmul.f32 %v802, %v810
        %v826 = vmul.f32 %v803, %v810
        %v827 = vmul.f32 %v804, %v810
        %v828 = vld [vmem:[%s3] sm:$0x1]
        %v830 = vlaneseq
        %v831 = vshrl.u32 %v830, 7
        %v832 = vsub.s32 0, %v831
        %v833 = vrot.slane %v828, %v832
        %v835 = vadd.f32 %v812, %v833
        %v836 = vadd.f32 %v813, %v833
        %v837 = vadd.f32 %v814, %v833
        %v838 = vadd.f32 %v815, %v833
        %v839 = vadd.f32 %v816, %v833
        %v840 = vadd.f32 %v817, %v833
        %v841 = vadd.f32 %v818, %v833
        %v842 = vadd.f32 %v819, %v833
        %v843 = vadd.f32 %v820, %v833
        %v844 = vadd.f32 %v821, %v833
        %v845 = vadd.f32 %v822, %v833
        %v846 = vadd.f32 %v823, %v833
        %v847 = vadd.f32 %v824, %v833
        %v848 = vadd.f32 %v825, %v833
        %v849 = vadd.f32 %v826, %v833
        %v850 = vadd.f32 %v827, %v833
        %v851 = vmax.f32 %v835, 0.0
        %v852 = vmax.f32 %v836, 0.0
        %v853 = vmax.f32 %v837, 0.0
        %v854 = vmax.f32 %v838, 0.0
        %v855 = vmax.f32 %v839, 0.0
        %v856 = vmax.f32 %v840, 0.0
        %v857 = vmax.f32 %v841, 0.0
        %v858 = vmax.f32 %v842, 0.0
        %v859 = vmax.f32 %v843, 0.0
        %v860 = vmax.f32 %v844, 0.0
        %v861 = vmax.f32 %v845, 0.0
        %v862 = vmax.f32 %v846, 0.0
        %v863 = vmax.f32 %v847, 0.0
        %v864 = vmax.f32 %v848, 0.0
        %v865 = vmax.f32 %v849, 0.0
        %v866 = vmax.f32 %v850, 0.0
        %v867 = vpack.c.bf16 %v852, %v851
        %v868 = vpack.c.bf16 %v854, %v853
        %v869 = vpack.c.bf16 %v856, %v855
        %v870 = vpack.c.bf16 %v858, %v857
        %v871 = vpack.c.bf16 %v860, %v859
        %v872 = vpack.c.bf16 %v862, %v861
        %v873 = vpack.c.bf16 %v864, %v863
        %v874 = vpack.c.bf16 %v866, %v865
        %v883 = vunpack.c.l.b16 %v867
        %v884 = vunpack.c.h.b16 %v867
        %v885 = vunpack.c.l.b16 %v868
        %v886 = vunpack.c.h.b16 %v868
        %v887 = vunpack.c.l.b16 %v869
        %v888 = vunpack.c.h.b16 %v869
        %v889 = vunpack.c.l.b16 %v870
        %v890 = vunpack.c.h.b16 %v870
        %v891 = vunpack.c.l.b16 %v871
        %v892 = vunpack.c.h.b16 %v871
        %v893 = vunpack.c.l.b16 %v872
        %v894 = vunpack.c.h.b16 %v872
        %v895 = vunpack.c.l.b16 %v873
        %v896 = vunpack.c.h.b16 %v873
        %v897 = vunpack.c.l.b16 %v874
        %v898 = vunpack.c.h.b16 %v874
        %v899 = vpack.c.b16 %v883, %v883
        %v900 = vpack.c.b16 %v884, %v884
        %v901 = vpack.c.b16 %v885, %v885
        %v902 = vpack.c.b16 %v886, %v886
        %v903 = vpack.c.b16 %v887, %v887
        %v904 = vpack.c.b16 %v888, %v888
        %v905 = vpack.c.b16 %v889, %v889
        %v906 = vpack.c.b16 %v890, %v890
        %v907 = vpack.c.b16 %v891, %v891
        %v908 = vpack.c.b16 %v892, %v892
        %v909 = vpack.c.b16 %v893, %v893
        %v910 = vpack.c.b16 %v894, %v894
        %v911 = vpack.c.b16 %v895, %v895
        %v912 = vpack.c.b16 %v896, %v896
        %v913 = vpack.c.b16 %v897, %v897
        %v914 = vpack.c.b16 %v898, %v898
        %931 = vst [vmem:[%s204] sm:$0xf] %v899
        %932 = vst [vmem:[%s204 + $0x4] sm:$0xf] %v900
        %933 = vst [vmem:[%s204 + $0x8] sm:$0xf] %v901
        %934 = vst [vmem:[%s204 + $0xc] sm:$0xf] %v902
        %935 = vst [vmem:[%s204 + $0x10] sm:$0xf] %v903
        %936 = vst [vmem:[%s204 + $0x14] sm:$0xf] %v904
        %937 = vst [vmem:[%s204 + $0x18] sm:$0xf] %v905
        %938 = vst [vmem:[%s204 + $0x1c] sm:$0xf] %v906
        %939 = vst [vmem:[%s204 + $0x20] sm:$0xf] %v907
        %940 = vst [vmem:[%s204 + $0x24] sm:$0xf] %v908
        %941 = vst [vmem:[%s204 + $0x28] sm:$0xf] %v909
        %942 = vst [vmem:[%s204 + $0x2c] sm:$0xf] %v910
        %943 = vst [vmem:[%s204 + $0x30] sm:$0xf] %v911
        %944 = vst [vmem:[%s204 + $0x34] sm:$0xf] %v912
        %945 = vst [vmem:[%s204 + $0x38] sm:$0xf] %v913
        %946 = vst [vmem:[%s204 + $0x3c] sm:$0xf] %v914
        %s947 = sand.u32 %s129, 1
        %s948 = scalar_lea.sflag [#allocation3], %s947
        %s949 = sand.u32 %s129, 1
        %s950 = smul.addr %s949, 64
        %s951 = scalar_lea.vmem [#allocation2], %s950
        // Predicated region
        $region37: #{tpu_custom_call.1} parent=35 // pred_check
          %p952 = pneg %p139
        $region38: #{tpu_custom_call.1} parent=35 // pred_check_branch
          %954 = sbr.rel (%p952) target = $region40
        $region39: #{tpu_custom_call.1} parent=35 // pred_region
          %s955 = smul.u32 8, %s23
          %s957 = ssub.s32 1024, 1024
          %958 = vsyncadd %s948, %s957
          %s959 = smul.addr %s955, 2
          %s960 = smul.addr %s22, 32
          %s961 = sadd.s32 %s959, %s960
          %s962 = smul.addr %s961, 64
          %s963 = scalar_lea.hbm %s4, %s962
          %s964 = sshll.u32 %s951, 4
          %s965 = int_to_ptr.vmem [resolvable:$true] %s964
          %970 = dma.vmem_to_hbm [thread:$0]  %s965, 1024, %s963, %s948, 64, 64, 4
        $region40: #{tpu_custom_call.1} parent=35 // pred_fallthru
          _
      $region36: #{tpu_custom_call.1} parent=5 // pred_fallthru
        _
      %p971 = scmp.le.s32.totalorder 2, %s13
      // Predicated region
      $region41: #{tpu_custom_call.1} parent=5 // pred_check
        %p972 = pneg %p971
      $region42: #{tpu_custom_call.1} parent=5 // pred_check_branch
        %974 = sbr.rel (%p972) target = $region44
      $region43: #{tpu_custom_call.1} parent=5 // pred_region
        %s975 = ssub.s32 %s13, 2
        // Predicated region
        $region45: #{tpu_custom_call.1} parent=43 // pred_check
          %p976 = pneg %p145
        $region46: #{tpu_custom_call.1} parent=43 // pred_check_branch
          %978 = sbr.rel (%p976) target = $region48
        $region47: #{tpu_custom_call.1} parent=43 // pred_region
          %s979 = sand.u32 %s130, 1
          %s980 = scalar_lea.sflag [#allocation3], %s979
          %s981 = sand.u32 %s130, 1
          %s982 = smul.addr %s981, 64
          %s983 = scalar_lea.vmem [#allocation2], %s982
          %984 = dma.done %s980, 1024
        $region48: #{tpu_custom_call.1} parent=43 // pred_fallthru
          _
      $region44: #{tpu_custom_call.1} parent=5 // pred_fallthru
        _
    $region6: #{tpu_custom_call.1} parent=1 // loop_footer
      %s17 = sadd.s32 1, %s13
    $region7: #{tpu_custom_call.1} parent=1 // loop_footer_branch
      %12 = sbr.rel target = $region3
    $region8: #{tpu_custom_call.1} parent=1 // loop_exit
      _
    %985 = vsyncpa [#allocation3], 1
    %s986 = scalar_lea.sflag [#allocation3], 1
    %987 = vsyncpa %s986, 1

</llo_original>
